<compile_context>
chip_gen: v6e
topology: v6e:2x2x1
jax: 0.10.0
libtpu: 0.0.40
codegen_flags: <defaults>
</compile_context>

<pallas_src>
import jax
import jax.numpy as jnp
from jax.experimental import pallas as pl
from jax.experimental.pallas import tpu as pltpu


def _round_up(n, m):
    return (n + m - 1) // m * m


def _adapter_kernel(x_ref, wd_ref, bd_ref, wu_ref, bu_ref, o_ref):
    # x_ref:  (TILE_T, d_model)        VMEM (streamed)
    # wd_ref: (d_model, d_down_p)      VMEM (resident, pre-transposed + padded)
    # bd_ref: (1, d_down_p)            VMEM (resident)
    # wu_ref: (d_down_p, d_out)        VMEM (resident, pre-transposed + padded)
    # bu_ref: (1, d_out)               VMEM (resident)
    # o_ref:  (TILE_T, d_out)          VMEM (streamed)
    x = x_ref[...]

    # Down projection: weights are already in (in, out) layout, so this is a
    # plain last-dim/first-dim contraction -- no in-kernel transpose.
    z = jnp.dot(x, wd_ref[...], preferred_element_type=jnp.float32)
    z = jnp.maximum(z + bd_ref[...].astype(jnp.float32), 0.0)   # Activations("relu")

    # Up projection (MXU accumulates in f32).
    y = jnp.dot(z.astype(wu_ref.dtype), wu_ref[...],
                preferred_element_type=jnp.float32)

    if o_ref.dtype == jnp.float32:
        o_ref[...] = y + bu_ref[...].astype(jnp.float32)
    else:
        # bf16-style epilogue: add the bias in the output dtype to avoid an
        # extra (TILE_T, d_out) f32 temp before the store.
        o_ref[...] = y.astype(o_ref.dtype) + bu_ref[...].astype(o_ref.dtype)


def _vmem_capacity_bytes():
    """Generation-aware VMEM capacity; conservative fallback = v7x per-TC."""
    try:
        return int(pltpu.get_tpu_info().vmem_capacity_bytes)
    except Exception:
        return 64 * 1024 * 1024


def prepare_adapter_params(w_down, b_down, w_up, b_up, dtype=None):
    """One-time parameter preparation (hoist out of the per-call path).

    Takes nn.Linear-layout parameters (out_features, in_features) + biases,
    makes the compute dtype an explicit choice, zero-pads the hidden
    (down-sample) dim to 128 lanes (exact: relu(0+0)=0 contributes nothing
    to the up-projection) and pre-transposes to matmul-friendly layout.

    Returns (wd_p, bd_p, wu_p, bu_p) with shapes
      (d_model, d_down_p), (1, d_down_p), (d_down_p, d_out), (1, d_out).
    """
    if dtype is None:
        dtype = w_down.dtype
    d_down, d_model = w_down.shape
    d_out = w_up.shape[0]
    d_down_p = _round_up(d_down, 128)

    wd_p = jnp.zeros((d_model, d_down_p), dtype).at[:, :d_down].set(
        w_down.astype(dtype).T)
    bd_p = jnp.zeros((1, d_down_p), dtype).at[0, :d_down].set(b_down.astype(dtype))
    wu_p = jnp.zeros((d_down_p, d_out), dtype).at[:d_down, :].set(
        w_up.astype(dtype).T)
    bu_p = b_up.astype(dtype).reshape(1, d_out)
    return wd_p, bd_p, wu_p, bu_p


def _pick_tile_t(T, d_model, d_down_p, d_out, itemsize, vmem_capacity):
    """Largest multiple-of-8 token tile under a generation-aware VMEM budget,
    capped so the grid has at least 2 steps (megacore sharding on v7x)."""
    budget = int(0.35 * vmem_capacity)        # ~45 MiB on 128 MiB chips, ~22 MiB on v7x
    max_tile = 2048 if vmem_capacity >= 96 * 1024 * 1024 else 1024
    weight_bytes = (d_model * d_down_p + d_down_p * d_out
                    + d_down_p + d_out) * itemsize
    # 2x (double-buffered) x / out streams + f32 z / y intermediates per row.
    per_row = 2 * (d_model + d_out) * itemsize + 4 * (d_down_p + d_out)
    avail = max(budget - 2 * weight_bytes, per_row * 8)
    tile = (avail // per_row) // 8 * 8
    tile = int(min(tile, max_tile))
    # Ensure >= 2 grid steps when possible so both v7x TensorCores get work.
    tile = min(tile, max(_round_up(pl.cdiv(T, 2), 8), 8))
    return max(min(tile, _round_up(T, 8)), 8)


def output_adapter_apply(x, params, *, force_pallas=False,
                         min_tokens_for_pallas=512):
    """x: (B, S, d_model); params from prepare_adapter_params.
    Returns (B, S, d_out)."""
    wd_p, bd_p, wu_p, bu_p = params
    B, S, D = x.shape
    d_down_p = wd_p.shape[1]
    d_out = wu_p.shape[1]
    T = B * S
    dtype = x.dtype
    itemsize = jnp.dtype(dtype).itemsize

    # Tiny problems: per-call / per-step overhead dwarfs the compute; let XLA
    # fuse it instead.
    if not force_pallas and T < min_tokens_for_pallas:
        z = jnp.maximum(x @ wd_p.astype(dtype) + bd_p.astype(dtype), 0.0)
        return (z @ wu_p.astype(dtype) + bu_p.astype(dtype)).astype(dtype)

    vmem_capacity = _vmem_capacity_bytes()
    tile_t = _pick_tile_t(T, D, d_down_p, d_out, itemsize, vmem_capacity)
    # No activation padding: Pallas masks the trailing partial block's stores;
    # OOB input rows only feed OOB (discarded) output rows.
    grid = (pl.cdiv(T, tile_t),)

    x2d = x.reshape(T, D)

    weight_bytes = (D * d_down_p + d_down_p * d_out + d_down_p + d_out) * itemsize
    est_vmem = (2 * weight_bytes
                + 2 * tile_t * (D + d_out) * itemsize
                + tile_t * (d_down_p + d_out) * 4)
    vmem_limit = int(min(max(32 * 1024 * 1024, 2 * est_vmem),
                         int(0.75 * vmem_capacity)))

    cost = pl.CostEstimate(
        flops=2 * T * D * d_down_p + 2 * T * d_down_p * d_out,
        transcendentals=0,
        bytes_accessed=(T * D + T * d_out) * itemsize + weight_bytes,
    )

    out2d = pl.pallas_call(
        _adapter_kernel,
        out_shape=jax.ShapeDtypeStruct((T, d_out), dtype),
        grid=grid,
        in_specs=[
            pl.BlockSpec((tile_t, D), lambda i: (i, 0)),          # x tile (streamed)
            pl.BlockSpec((D, d_down_p), lambda i: (0, 0)),        # W_down^T (resident)
            pl.BlockSpec((1, d_down_p), lambda i: (0, 0)),        # b_down   (resident)
            pl.BlockSpec((d_down_p, d_out), lambda i: (0, 0)),    # W_up^T   (resident)
            pl.BlockSpec((1, d_out), lambda i: (0, 0)),           # b_up     (resident)
        ],
        out_specs=pl.BlockSpec((tile_t, d_out), lambda i: (i, 0)),
        compiler_params=pltpu.CompilerParams(
            dimension_semantics=("parallel",),
            vmem_limit_bytes=vmem_limit,
        ),
        cost_estimate=cost,
    )(x2d, wd_p, bd_p, wu_p, bu_p)

    return out2d.reshape(B, S, d_out)


def output_adapter(x, w_down, b_down, w_up, b_up, **kwargs):
    """Convenience one-shot wrapper. In production, hoist
    prepare_adapter_params out of the step function and reuse the result."""
    params = prepare_adapter_params(w_down, b_down, w_up, b_up, dtype=x.dtype)
    return output_adapter_apply(x, params, **kwargs)


if __name__ == "__main__":
    # Small shapes consistent with the module:
    #   d_model = 32, reduction_factor = 16 -> down_sample_size = 2
    #   output_dim = 32, batch = 2, seq = 8
    B, S, D = 2, 8, 32
    d_down = D // 16
    d_out = 32

    key = jax.random.PRNGKey(0)
    kx, kwd, kbd, kwu, kbu = jax.random.split(key, 5)

    x = jax.random.normal(kx, (B, S, D), dtype=jnp.float32)
    # nn.Linear-style parameters (out_features, in_features) + bias.
    w_down = jax.random.normal(kwd, (d_down, D), dtype=jnp.float32) * 0.1
    b_down = jax.random.normal(kbd, (d_down,), dtype=jnp.float32) * 0.1
    w_up = jax.random.normal(kwu, (d_out, d_down), dtype=jnp.float32) * 0.1
    b_up = jax.random.normal(kbu, (d_out,), dtype=jnp.float32) * 0.1

    # One-time parameter prep (pad + pre-transpose), hoisted out of the call.
    params = prepare_adapter_params(w_down, b_down, w_up, b_up, dtype=jnp.float32)

    # force_pallas=True so the Pallas kernel (not the small-size XLA fallback)
    # is actually exercised at this tiny demo size.
    out = output_adapter_apply(x, params, force_pallas=True)
    out = jax.block_until_ready(out)

    # Reference check in plain JAX (same math as the PyTorch forward).
    z_ref = jnp.maximum(x @ w_down.T + b_down, 0.0)
    ref = z_ref @ w_up.T + b_up
    assert out.shape == (B, S, d_out)
    assert jnp.allclose(out, ref, atol=1e-5, rtol=1e-5), float(
        jnp.max(jnp.abs(out - ref)))

    print("KERNEL_OK")
</pallas_src>

<mosaic_0001>
module attributes {stable_mosaic.version = 11 : i64} {
  func.func @_adapter_kernel(%arg0: i32, %arg1: memref<8x32xf32, #tpu.memory_space<vmem>>, %arg2: memref<32x128xf32, #tpu.memory_space<vmem>>, %arg3: memref<1x128xf32, #tpu.memory_space<vmem>>, %arg4: memref<128x32xf32, #tpu.memory_space<vmem>>, %arg5: memref<1x32xf32, #tpu.memory_space<vmem>>, %arg6: memref<8x32xf32, #tpu.memory_space<vmem>>) attributes {dimension_semantics = [#tpu.dimension_semantics<parallel>], iteration_bounds = array<i64: 2>, scalar_prefetch = 0 : i64, scratch_operands = 0 : i64, tpu.core_type = #tpu.core_type<tc>, window_params = [{transform_indices = @transform_0, window_bounds = array<i64: 8, 32>}, {pipeline_mode = #tpu.pipeline_mode<synchronous>, transform_indices = @transform_1, window_bounds = array<i64: 32, 128>}, {pipeline_mode = #tpu.pipeline_mode<synchronous>, transform_indices = @transform_2, window_bounds = array<i64: 1, 128>}, {pipeline_mode = #tpu.pipeline_mode<synchronous>, transform_indices = @transform_3, window_bounds = array<i64: 128, 32>}, {pipeline_mode = #tpu.pipeline_mode<synchronous>, transform_indices = @transform_4, window_bounds = array<i64: 1, 32>}, {transform_indices = @transform_5, window_bounds = array<i64: 8, 32>}]} {
    %c0 = arith.constant 0 : index
    %c0_0 = arith.constant 0 : index
    %0 = vector.load %arg1[%c0, %c0_0] : memref<8x32xf32, #tpu.memory_space<vmem>>, vector<8x32xf32>
    %c0_1 = arith.constant 0 : index
    %c0_2 = arith.constant 0 : index
    %1 = vector.load %arg2[%c0_1, %c0_2] : memref<32x128xf32, #tpu.memory_space<vmem>>, vector<32x128xf32>
    %cst = arith.constant dense<0.000000e+00> : vector<8x128xf32>
    %2 = tpu.matmul %0, %1, %cst {dimension_numbers = #tpu.dot_dimension_numbers<[1], [0], [0], [1], [0, 0, 1, 1], [], []>} : vector<8x32xf32>, vector<32x128xf32>, vector<8x128xf32> -> vector<8x128xf32>
    %c0_3 = arith.constant 0 : index
    %c0_4 = arith.constant 0 : index
    %3 = vector.load %arg3[%c0_3, %c0_4] : memref<1x128xf32, #tpu.memory_space<vmem>>, vector<1x128xf32>
    %4 = vector.broadcast %3 : vector<1x128xf32> to vector<8x128xf32>
    %5 = arith.addf %2, %4 : vector<8x128xf32>
    %cst_5 = arith.constant 0.000000e+00 : f32
    %6 = vector.broadcast %cst_5 : f32 to vector<8x128xf32>
    %7 = arith.maximumf %5, %6 : vector<8x128xf32>
    %c0_6 = arith.constant 0 : index
    %c0_7 = arith.constant 0 : index
    %8 = vector.load %arg4[%c0_6, %c0_7] : memref<128x32xf32, #tpu.memory_space<vmem>>, vector<128x32xf32>
    %cst_8 = arith.constant dense<0.000000e+00> : vector<8x32xf32>
    %9 = tpu.matmul %7, %8, %cst_8 {dimension_numbers = #tpu.dot_dimension_numbers<[1], [0], [0], [1], [0, 0, 1, 1], [], []>} : vector<8x128xf32>, vector<128x32xf32>, vector<8x32xf32> -> vector<8x32xf32>
    %c0_9 = arith.constant 0 : index
    %c0_10 = arith.constant 0 : index
    %10 = vector.load %arg5[%c0_9, %c0_10] : memref<1x32xf32, #tpu.memory_space<vmem>>, vector<1x32xf32>
    %11 = vector.broadcast %10 : vector<1x32xf32> to vector<8x32xf32>
    %12 = arith.addf %9, %11 : vector<8x32xf32>
    %c0_11 = arith.constant 0 : index
    %c0_12 = arith.constant 0 : index
    %13 = vector.load %arg6[%c0_11, %c0_12] : memref<8x32xf32, #tpu.memory_space<vmem>>, vector<8x32xf32>
    tpu.vector_store %arg6[%c0_11, %c0_12], %12 {strides = array<i32>} : memref<8x32xf32, #tpu.memory_space<vmem>>, vector<8x32xf32>,
    return
  }
  func.func @transform_0(%arg0: i32) -> (i32, i32) {
    %c0_i32 = arith.constant 0 : i32
    %c0_i32_0 = arith.constant 0 : i32
    return %arg0, %c0_i32 : i32, i32
  }
  func.func @transform_1(%arg0: i32) -> (i32, i32) {
    %c0_i32 = arith.constant 0 : i32
    %c0_i32_0 = arith.constant 0 : i32
    %c0_i32_1 = arith.constant 0 : i32
    return %c0_i32, %c0_i32_0 : i32, i32
  }
  func.func @transform_2(%arg0: i32) -> (i32, i32) {
    %c0_i32 = arith.constant 0 : i32
    %c0_i32_0 = arith.constant 0 : i32
    %c0_i32_1 = arith.constant 0 : i32
    return %c0_i32, %c0_i32_0 : i32, i32
  }
  func.func @transform_3(%arg0: i32) -> (i32, i32) {
    %c0_i32 = arith.constant 0 : i32
    %c0_i32_0 = arith.constant 0 : i32
    %c0_i32_1 = arith.constant 0 : i32
    return %c0_i32, %c0_i32_0 : i32, i32
  }
  func.func @transform_4(%arg0: i32) -> (i32, i32) {
    %c0_i32 = arith.constant 0 : i32
    %c0_i32_0 = arith.constant 0 : i32
    %c0_i32_1 = arith.constant 0 : i32
    return %c0_i32, %c0_i32_0 : i32, i32
  }
  func.func @transform_5(%arg0: i32) -> (i32, i32) {
    %c0_i32 = arith.constant 0 : i32
    %c0_i32_0 = arith.constant 0 : i32
    return %arg0, %c0_i32 : i32, i32
  }
}

</mosaic_0001>

<llo_original>
// kernel: tpu_custom_call.1
$region0: #{tpu_custom_call.1}
  #allocation0 [shape = 'u32[]', space=smem, size = 0x4, offset = 0x4, fixed_abs, tag = 'smem constant byte address 0x4 - core index']
  #allocation1 [shape = 'u32[144,128]{1,0:T(1,128)}', space=vmem, size = 0x12000, scoped, tag = 'internal scratch']
  %s0 = inlined_call_operand.vmem [shape: f32[16,32], index: 0, kind: input, shape index: {}]
  %s1 = inlined_call_operand.vmem [shape: f32[32,128], index: 1, kind: input, shape index: {}]
  %s2 = inlined_call_operand.vmem [shape: f32[1,128], index: 2, kind: input, shape index: {}]
  %s3 = inlined_call_operand.vmem [shape: f32[128,32], index: 3, kind: input, shape index: {}]
  %s4 = inlined_call_operand.vmem [shape: f32[1,32], index: 4, kind: input, shape index: {}]
  %s5 = inlined_call_operand.hbm [shape: f32[16,32], index: 5, kind: output, shape index: {}]
  %s6 = sld [smem:[#allocation0]]
  $region53: #{tpu_custom_call.1} parent=0
    _
  %s8 = ssub.s32 1, %s6
  %s9 = scalar_select 0, %s8, %s6
  $region1: #{tpu_custom_call.1} parent=0
    #allocation2 [shape = 'u8[8192]{0}', space=vmem, size = 0x2000, scoped, tag = 'output window, operand 0']
    #allocation3 [shape = 's32[2]{0}', space=sflag, size = 0x8, scoped, tag = 'scoped memory for tpu_custom_call.1']
    %10 = vsyncpa [#allocation3], 0
    %s11 = scalar_lea.sflag [#allocation3], 1
    %12 = vsyncpa %s11, 0
    loop: start=0, step=1, limit=4
    $region2: #{tpu_custom_call.1} parent=1 // loop_pre_header
      _
    $region3: #{tpu_custom_call.1} parent=1 // loop_header
      %s14 = sphi 0, %s18
      %p15 = scmp.ge.s32.totalorder %s14, 4
      %s24 = sphi 0, %s26
      %s27 = sphi 0, %s24
      %s28 = sphi 0, %s27
      %s44 = sphi 0, %s28
      %s48 = sphi 0, %s48
      %s50 = sphi 0, %s48
      %s51 = sphi 0, %s50
      %s65 = sphi 0, %s51
      %s69 = sphi 0, %s69
      %s71 = sphi 0, %s69
      %s72 = sphi 0, %s71
      %s86 = sphi 0, %s72
      %s90 = sphi 0, %s90
      %s92 = sphi 0, %s90
      %s93 = sphi 0, %s92
      %s107 = sphi 0, %s93
      %s111 = sphi 0, %s111
      %s113 = sphi 0, %s111
      %s114 = sphi 0, %s113
      %s128 = sphi 0, %s114
      %s134 = sphi 0, %s136
      %s137 = sphi 0, %s134
      %s138 = sphi 0, %s137
      %s154 = sphi 0, %s138
    $region4: #{tpu_custom_call.1} parent=1 // loop_header_branch
      %17 = sbr.rel (%p15) target = $region8
    $region5: #{tpu_custom_call.1} parent=1 // loop_body
      %s19 = ssub.s32 %s14, 1
      %s20 = ssub.s32 %s14, 2
      %s21 = sadd.s32 %s14, 1
      %s22 = ssub.s32 %s14, %s21
      %p23 = scmp.eq.s32.totalorder %s22, 0
      %s25 = sadd.s32 %s24, 1
      %s26 = scalar_select %p23, %s24, %s25
      %p29 = pneg %p23
      %p30 = scmp.eq.s32.totalorder %s14, 1
      %p31 = por %p29, %p30
      %p32 = scmp.ne.s32.totalorder %s24, %s27
      %p33 = scmp.eq.s32.totalorder %s14, 0
      %p34 = por %p32, %p33
      %p35 = scmp.ne.s32.totalorder %s24, %s27
      %p36 = scmp.eq.s32.totalorder %s19, 1
      %p37 = por %p35, %p36
      %p38 = scmp.ne.s32.totalorder %s27, %s28
      %p39 = scmp.eq.s32.totalorder %s19, 0
      %p40 = por %p38, %p39
      %p41 = scmp.ne.s32.totalorder %s27, %s28
      %p42 = scmp.eq.s32.totalorder %s20, 1
      %p43 = por %p41, %p42
      %p45 = scmp.ne.s32.totalorder %s28, %s44
      %p46 = scmp.eq.s32.totalorder %s20, 0
      %p47 = por %p45, %p46
      %s49 = sadd.s32 %s48, 1
      %p52 = scmp.eq.s32.totalorder %s14, 1
      %p53 = scmp.ne.s32.totalorder %s48, %s50
      %p54 = scmp.eq.s32.totalorder %s14, 0
      %p55 = por %p53, %p54
      %p56 = scmp.ne.s32.totalorder %s48, %s50
      %p57 = scmp.eq.s32.totalorder %s19, 1
      %p58 = por %p56, %p57
      %p59 = scmp.ne.s32.totalorder %s50, %s51
      %p60 = scmp.eq.s32.totalorder %s19, 0
      %p61 = por %p59, %p60
      %p62 = scmp.ne.s32.totalorder %s50, %s51
      %p63 = scmp.eq.s32.totalorder %s20, 1
      %p64 = por %p62, %p63
      %p66 = scmp.ne.s32.totalorder %s51, %s65
      %p67 = scmp.eq.s32.totalorder %s20, 0
      %p68 = por %p66, %p67
      %s70 = sadd.s32 %s69, 1
      %p73 = scmp.eq.s32.totalorder %s14, 1
      %p74 = scmp.ne.s32.totalorder %s69, %s71
      %p75 = scmp.eq.s32.totalorder %s14, 0
      %p76 = por %p74, %p75
      %p77 = scmp.ne.s32.totalorder %s69, %s71
      %p78 = scmp.eq.s32.totalorder %s19, 1
      %p79 = por %p77, %p78
      %p80 = scmp.ne.s32.totalorder %s71, %s72
      %p81 = scmp.eq.s32.totalorder %s19, 0
      %p82 = por %p80, %p81
      %p83 = scmp.ne.s32.totalorder %s71, %s72
      %p84 = scmp.eq.s32.totalorder %s20, 1
      %p85 = por %p83, %p84
      %p87 = scmp.ne.s32.totalorder %s72, %s86
      %p88 = scmp.eq.s32.totalorder %s20, 0
      %p89 = por %p87, %p88
      %s91 = sadd.s32 %s90, 1
      %p94 = scmp.eq.s32.totalorder %s14, 1
      %p95 = scmp.ne.s32.totalorder %s90, %s92
      %p96 = scmp.eq.s32.totalorder %s14, 0
      %p97 = por %p95, %p96
      %p98 = scmp.ne.s32.totalorder %s90, %s92
      %p99 = scmp.eq.s32.totalorder %s19, 1
      %p100 = por %p98, %p99
      %p101 = scmp.ne.s32.totalorder %s92, %s93
      %p102 = scmp.eq.s32.totalorder %s19, 0
      %p103 = por %p101, %p102
      %p104 = scmp.ne.s32.totalorder %s92, %s93
      %p105 = scmp.eq.s32.totalorder %s20, 1
      %p106 = por %p104, %p105
      %p108 = scmp.ne.s32.totalorder %s93, %s107
      %p109 = scmp.eq.s32.totalorder %s20, 0
      %p110 = por %p108, %p109
      %s112 = sadd.s32 %s111, 1
      %p115 = scmp.eq.s32.totalorder %s14, 1
      %p116 = scmp.ne.s32.totalorder %s111, %s113
      %p117 = scmp.eq.s32.totalorder %s14, 0
      %p118 = por %p116, %p117
      %p119 = scmp.ne.s32.totalorder %s111, %s113
      %p120 = scmp.eq.s32.totalorder %s19, 1
      %p121 = por %p119, %p120
      %p122 = scmp.ne.s32.totalorder %s113, %s114
      %p123 = scmp.eq.s32.totalorder %s19, 0
      %p124 = por %p122, %p123
      %p125 = scmp.ne.s32.totalorder %s113, %s114
      %p126 = scmp.eq.s32.totalorder %s20, 1
      %p127 = por %p125, %p126
      %p129 = scmp.ne.s32.totalorder %s114, %s128
      %p130 = scmp.eq.s32.totalorder %s20, 0
      %p131 = por %p129, %p130
      %s132 = ssub.s32 %s14, %s21
      %p133 = scmp.eq.s32.totalorder %s132, 0
      %s135 = sadd.s32 %s134, 1
      %s136 = scalar_select %p133, %s134, %s135
      %p139 = pneg %p133
      %p140 = scmp.eq.s32.totalorder %s14, 1
      %p141 = por %p139, %p140
      %p142 = scmp.ne.s32.totalorder %s134, %s137
      %p143 = scmp.eq.s32.totalorder %s14, 0
      %p144 = por %p142, %p143
      %p145 = scmp.ne.s32.totalorder %s134, %s137
      %p146 = scmp.eq.s32.totalorder %s19, 1
      %p147 = por %p145, %p146
      %p148 = scmp.ne.s32.totalorder %s137, %s138
      %p149 = scmp.eq.s32.totalorder %s19, 0
      %p150 = por %p148, %p149
      %p151 = scmp.ne.s32.totalorder %s137, %s138
      %p152 = scmp.eq.s32.totalorder %s20, 1
      %p153 = por %p151, %p152
      %p155 = scmp.ne.s32.totalorder %s138, %s154
      %p156 = scmp.eq.s32.totalorder %s20, 0
      %p157 = por %p155, %p156
      %p158 = scmp.le.s32.totalorder 1, %s14
      %p159 = scmp.lt.s32.totalorder %s14, 3
      %p160 = pnand %p158, %p159
      %p161 = pneg %p160
      // Predicated region
      $region9: #{tpu_custom_call.1} parent=5 // pred_check
        _
      $region10: #{tpu_custom_call.1} parent=5 // pred_check_branch
        %163 = sbr.rel (%p160) target = $region12
      $region11: #{tpu_custom_call.1} parent=5 // pred_region
        %s164 = ssub.s32 %s14, 1
        // Predicated region
        $region13: #{tpu_custom_call.1} parent=11 // pred_check
          %p165 = pneg %p61
        $region14: #{tpu_custom_call.1} parent=11 // pred_check_branch
          %167 = sbr.rel (%p165) target = $region16
        $region15: #{tpu_custom_call.1} parent=11 // pred_region
          _
        $region16: #{tpu_custom_call.1} parent=11 // pred_fallthru
          _
        // Predicated region
        $region17: #{tpu_custom_call.1} parent=11 // pred_check
          %p168 = pneg %p82
        $region18: #{tpu_custom_call.1} parent=11 // pred_check_branch
          %170 = sbr.rel (%p168) target = $region20
        $region19: #{tpu_custom_call.1} parent=11 // pred_region
          _
        $region20: #{tpu_custom_call.1} parent=11 // pred_fallthru
          _
        // Predicated region
        $region21: #{tpu_custom_call.1} parent=11 // pred_check
          %p171 = pneg %p103
        $region22: #{tpu_custom_call.1} parent=11 // pred_check_branch
          %173 = sbr.rel (%p171) target = $region24
        $region23: #{tpu_custom_call.1} parent=11 // pred_region
          _
        $region24: #{tpu_custom_call.1} parent=11 // pred_fallthru
          _
        // Predicated region
        $region25: #{tpu_custom_call.1} parent=11 // pred_check
          %p174 = pneg %p124
        $region26: #{tpu_custom_call.1} parent=11 // pred_check_branch
          %176 = sbr.rel (%p174) target = $region28
        $region27: #{tpu_custom_call.1} parent=11 // pred_region
          _
        $region28: #{tpu_custom_call.1} parent=11 // pred_fallthru
          _
      $region12: #{tpu_custom_call.1} parent=5 // pred_fallthru
        _
      %p177 = scmp.lt.s32.totalorder %s14, 2
      // Predicated region
      $region29: #{tpu_custom_call.1} parent=5 // pred_check
        %p178 = pneg %p177
      $region30: #{tpu_custom_call.1} parent=5 // pred_check_branch
        %180 = sbr.rel (%p178) target = $region32
      $region31: #{tpu_custom_call.1} parent=5 // pred_region
        // Predicated region
        $region33: #{tpu_custom_call.1} parent=31 // pred_check
          %p181 = pneg %p34
        $region34: #{tpu_custom_call.1} parent=31 // pred_check_branch
          %183 = sbr.rel (%p181) target = $region36
        $region35: #{tpu_custom_call.1} parent=31 // pred_region
          %p184 = scmp.lt.s32.totalorder %s14, 1
          %s185 = scalar_select %p184, %s14, 1
          %s186 = smul.addr %s185, 8
          %s187 = scalar_lea.vmem %s0, %s186
        $region36: #{tpu_custom_call.1} parent=31 // pred_fallthru
          _
      $region32: #{tpu_custom_call.1} parent=5 // pred_fallthru
        _
      %p188 = scmp.le.s32.totalorder 1, %s14
      %p189 = scmp.lt.s32.totalorder %s14, 3
      %p190 = pnand %p188, %p189
      %p191 = pneg %p190
      // Predicated region
      $region37: #{tpu_custom_call.1} parent=5 // pred_check
        _
      $region38: #{tpu_custom_call.1} parent=5 // pred_check_branch
        %193 = sbr.rel (%p190) target = $region40
      $region39: #{tpu_custom_call.1} parent=5 // pred_region
        %s194 = ssub.s32 %s14, 1
        %p195 = scmp.lt.s32.totalorder %s19, 1
        %s196 = scalar_select %p195, %s19, 1
        %s197 = smul.addr %s196, 8
        %s198 = scalar_lea.vmem %s0, %s197
        %p199 = pneg %p40
        %p200 = pneg %p37
        %p201 = pneg %p61
        %p202 = pneg %p58
        %p203 = pneg %p82
        %p204 = pneg %p79
        %p205 = pneg %p103
        %p206 = pneg %p100
        %p207 = pneg %p124
        %p208 = pneg %p121
        %p209 = pneg %p150
        %p210 = pneg %p147
        %s211 = sand.u32 %s137, 1
        %s212 = scalar_lea.sflag [#allocation3], %s211
        %s213 = sand.u32 %s137, 1
        %s214 = smul.addr %s213, 8
        %s215 = scalar_lea.vmem [#allocation2], %s214
        %p216 = scmp.lt.s32.totalorder %s19, 1
        %s217 = scalar_select %p216, %s19, 1
        %s218 = smul.addr %s217, 8
        %s219 = scalar_lea.vmem %s0, %s218
        %v220 = vld [vmem:[%s219] sm:$0xff]
        %v221 = vld [vmem:[%s1] sm:$0xff]
        %v222 = vld [vmem:[%s1 + $0x8] sm:$0xff]
        %v223 = vld [vmem:[%s1 + $0x10] sm:$0xff]
        %v224 = vld [vmem:[%s1 + $0x18] sm:$0xff]
        %v225 = vld [vmem:[%s2] sm:$0x1]
        %v227 = vlaneseq
        %v228 = vshrl.u32 %v227, 7
        %v229 = vsub.s32 0, %v228
        %v230 = vrot.slane %v225, %v229
        %vm232 = vcmask 261120
        %v234 = vsel %vm232, %v220, 0
        %236 = vmatprep.subr.mxu0 0.0
        %237 = vmatpush1.msra.mxu0 0.0
        %238 = vmatprep.subr.mxu0 0.0
        %239 = vmatpush1.msra.mxu0 0.0
        %240 = vmatprep.subr.mxu0 0.0
        %241 = vmatpush1.msra.mxu0 0.0
        %242 = vmatprep.subr.mxu0 0.0
        %243 = vmatpush1.msra.mxu0 0.0
        %244 = vmatprep.subr.mxu0 0.0
        %245 = vmatpush1.msra.mxu0 0.0
        %246 = vmatprep.subr.mxu0 0.0
        %247 = vmatpush1.msra.mxu0 0.0
        %248 = vmatprep.subr.mxu0 0.0
        %249 = vmatpush1.msra.mxu0 0.0
        %250 = vmatprep.subr.mxu0 0.0
        %251 = vmatpush1.msra.mxu0 0.0
        %252 = vmatprep.subr.mxu0 0.0
        %253 = vmatpush1.msra.mxu0 0.0
        %254 = vmatprep.subr.mxu0 0.0
        %255 = vmatpush1.msra.mxu0 0.0
        %256 = vmatprep.subr.mxu0 0.0
        %257 = vmatpush1.msra.mxu0 0.0
        %258 = vmatprep.subr.mxu0 0.0
        %259 = vmatpush1.msra.mxu0 0.0
        %260 = vmatprep.subr.mxu0 0.0
        %261 = vmatpush1.msra.mxu0 %v224
        %262 = vmatprep.subr.mxu0 0.0
        %263 = vmatpush1.msra.mxu0 %v223
        %264 = vmatprep.subr.mxu0 0.0
        %265 = vmatpush1.msra.mxu0 %v222
        %266 = vmatprep.subr.mxu0 0.0
        %267 = vmatpush1.msra.mxu0 %v221
        %268 = vmatprep.subr.mxu0 0.0
        %269 = vmatpush2.msra.mxu0 0.0
        %270 = vmatprep.subr.mxu0 0.0
        %271 = vmatpush2.msra.mxu0 0.0
        %272 = vmatprep.subr.mxu0 0.0
        %273 = vmatpush2.msra.mxu0 0.0
        %274 = vmatprep.subr.mxu0 0.0
        %275 = vmatpush2.msra.mxu0 0.0
        %276 = vmatprep.subr.mxu0 0.0
        %277 = vmatpush2.msra.mxu0 0.0
        %278 = vmatprep.subr.mxu0 0.0
        %279 = vmatpush2.msra.mxu0 0.0
        %280 = vmatprep.subr.mxu0 0.0
        %281 = vmatpush2.msra.mxu0 0.0
        %282 = vmatprep.subr.mxu0 0.0
        %283 = vmatpush2.msra.mxu0 0.0
        %284 = vmatprep.subr.mxu0 0.0
        %285 = vmatpush2.msra.mxu0 0.0
        %286 = vmatprep.subr.mxu0 0.0
        %287 = vmatpush2.msra.mxu0 0.0
        %288 = vmatprep.subr.mxu0 0.0
        %289 = vmatpush2.msra.mxu0 0.0
        %290 = vmatprep.subr.mxu0 0.0
        %291 = vmatpush2.msra.mxu0 0.0
        %292 = vmatprep.subr.mxu0 0.0
        %293 = vmatpush2.msra.mxu0 0.0
        %294 = vmatprep.subr.mxu0 0.0
        %295 = vmatpush2.msra.mxu0 0.0
        %296 = vmatprep.subr.mxu0 0.0
        %297 = vmatpush2.msra.mxu0 0.0
        %298 = vmatprep.subr.mxu0 0.0
        %299 = vmatpush2.msra.mxu0 0.0
        %300 = vmatprep.mubr.f32.mxu0 0.0
        %301 = vmatmul.mubr.f32.gmra.mxu0 %v234
        %v302 = vpop.f32.mrf.mxu0
        %v303 = vadd.f32 %v230, %v302
        %v304 = vpop.f32.mrf.mxu0
        %305 = vdwg.mxu0
        %v306 = vmax.f32 %v303, 0.0
        %v307 = vld [vmem:[%s3] sm:$0xff]
        %v308 = vld [vmem:[%s3 + $0x8] sm:$0xff]
        %v309 = vld [vmem:[%s3 + $0x10] sm:$0xff]
        %v310 = vld [vmem:[%s3 + $0x18] sm:$0xff]
        %v311 = vld [vmem:[%s3 + $0x20] sm:$0xff]
        %v312 = vld [vmem:[%s3 + $0x28] sm:$0xff]
        %v313 = vld [vmem:[%s3 + $0x30] sm:$0xff]
        %v314 = vld [vmem:[%s3 + $0x38] sm:$0xff]
        %v315 = vld [vmem:[%s3 + $0x40] sm:$0xff]
        %v316 = vld [vmem:[%s3 + $0x48] sm:$0xff]
        %v317 = vld [vmem:[%s3 + $0x50] sm:$0xff]
        %v318 = vld [vmem:[%s3 + $0x58] sm:$0xff]
        %v319 = vld [vmem:[%s3 + $0x60] sm:$0xff]
        %v320 = vld [vmem:[%s3 + $0x68] sm:$0xff]
        %v321 = vld [vmem:[%s3 + $0x70] sm:$0xff]
        %v322 = vld [vmem:[%s3 + $0x78] sm:$0xff]
        %v323 = vld [vmem:[%s4] sm:$0x1]
        %v325 = vlaneseq
        %v326 = vshrl.u32 %v325, 7
        %v327 = vsub.s32 0, %v326
        %v328 = vrot.slane %v323, %v327
        %330 = vmatprep.subr.mxu0 0.0
        %331 = vmatpush1.msra.mxu0 %v322
        %332 = vmatprep.subr.mxu0 0.0
        %333 = vmatpush1.msra.mxu0 %v321
        %334 = vmatprep.subr.mxu0 0.0
        %335 = vmatpush1.msra.mxu0 %v320
        %336 = vmatprep.subr.mxu0 0.0
        %337 = vmatpush1.msra.mxu0 %v319
        %338 = vmatprep.subr.mxu0 0.0
        %339 = vmatpush1.msra.mxu0 %v318
        %340 = vmatprep.subr.mxu0 0.0
        %341 = vmatpush1.msra.mxu0 %v317
        %342 = vmatprep.subr.mxu0 0.0
        %343 = vmatpush1.msra.mxu0 %v316
        %344 = vmatprep.subr.mxu0 0.0
        %345 = vmatpush1.msra.mxu0 %v315
        %346 = vmatprep.subr.mxu0 0.0
        %347 = vmatpush1.msra.mxu0 %v314
        %348 = vmatprep.subr.mxu0 0.0
        %349 = vmatpush1.msra.mxu0 %v313
        %350 = vmatprep.subr.mxu0 0.0
        %351 = vmatpush1.msra.mxu0 %v312
        %352 = vmatprep.subr.mxu0 0.0
        %353 = vmatpush1.msra.mxu0 %v311
        %354 = vmatprep.subr.mxu0 0.0
        %355 = vmatpush1.msra.mxu0 %v310
        %356 = vmatprep.subr.mxu0 0.0
        %357 = vmatpush1.msra.mxu0 %v309
        %358 = vmatprep.subr.mxu0 0.0
        %359 = vmatpush1.msra.mxu0 %v308
        %360 = vmatprep.subr.mxu0 0.0
        %361 = vmatpush1.msra.mxu0 %v307
        %362 = vmatprep.subr.mxu0 0.0
        %363 = vmatpush2.msra.mxu0 0.0
        %364 = vmatprep.subr.mxu0 0.0
        %365 = vmatpush2.msra.mxu0 0.0
        %366 = vmatprep.subr.mxu0 0.0
        %367 = vmatpush2.msra.mxu0 0.0
        %368 = vmatprep.subr.mxu0 0.0
        %369 = vmatpush2.msra.mxu0 0.0
        %370 = vmatprep.subr.mxu0 0.0
        %371 = vmatpush2.msra.mxu0 0.0
        %372 = vmatprep.subr.mxu0 0.0
        %373 = vmatpush2.msra.mxu0 0.0
        %374 = vmatprep.subr.mxu0 0.0
        %375 = vmatpush2.msra.mxu0 0.0
        %376 = vmatprep.subr.mxu0 0.0
        %377 = vmatpush2.msra.mxu0 0.0
        %378 = vmatprep.subr.mxu0 0.0
        %379 = vmatpush2.msra.mxu0 0.0
        %380 = vmatprep.subr.mxu0 0.0
        %381 = vmatpush2.msra.mxu0 0.0
        %382 = vmatprep.subr.mxu0 0.0
        %383 = vmatpush2.msra.mxu0 0.0
        %384 = vmatprep.subr.mxu0 0.0
        %385 = vmatpush2.msra.mxu0 0.0
        %386 = vmatprep.subr.mxu0 0.0
        %387 = vmatpush2.msra.mxu0 0.0
        %388 = vmatprep.subr.mxu0 0.0
        %389 = vmatpush2.msra.mxu0 0.0
        %390 = vmatprep.subr.mxu0 0.0
        %391 = vmatpush2.msra.mxu0 0.0
        %392 = vmatprep.subr.mxu0 0.0
        %393 = vmatpush2.msra.mxu0 0.0
        %394 = vmatprep.mubr.f32.mxu0 0.0
        %395 = vmatmul.mubr.f32.gmra.mxu0 %v306
        %v396 = vpop.f32.mrf.mxu0
        %v397 = vadd.f32 %v328, %v396
        %v398 = vpop.f32.mrf.mxu0
        %399 = vdwg.mxu0
        %400 = vst.msk [vmem:[%s215] sm:$0xff] %vm232, %v397
        %s401 = sand.u32 %s137, 1
        %s402 = scalar_lea.sflag [#allocation3], %s401
        %s403 = sand.u32 %s137, 1
        %s404 = smul.addr %s403, 8
        %s405 = scalar_lea.vmem [#allocation2], %s404
        // Predicated region
        $region41: #{tpu_custom_call.1} parent=39 // pred_check
          %p406 = pneg %p147
        $region42: #{tpu_custom_call.1} parent=39 // pred_check_branch
          %408 = sbr.rel (%p406) target = $region44
        $region43: #{tpu_custom_call.1} parent=39 // pred_region
          %s410 = ssub.s32 128, 128
          %411 = vsyncadd %s402, %s410
          %s412 = smul.addr %s19, 128
          %s413 = scalar_lea.hbm %s5, %s412
          %s415 = sshll.u32 %s405, 4
          %s416 = int_to_ptr.vmem [resolvable:$true] %s415
          %418 = dma.vmem_to_hbm [thread:$0]  %s416, 128, %s413, %s402
        $region44: #{tpu_custom_call.1} parent=39 // pred_fallthru
          _
      $region40: #{tpu_custom_call.1} parent=5 // pred_fallthru
        _
      %p419 = scmp.le.s32.totalorder 2, %s14
      // Predicated region
      $region45: #{tpu_custom_call.1} parent=5 // pred_check
        %p420 = pneg %p419
      $region46: #{tpu_custom_call.1} parent=5 // pred_check_branch
        %422 = sbr.rel (%p420) target = $region48
      $region47: #{tpu_custom_call.1} parent=5 // pred_region
        %s423 = ssub.s32 %s14, 2
        // Predicated region
        $region49: #{tpu_custom_call.1} parent=47 // pred_check
          %p424 = pneg %p153
        $region50: #{tpu_custom_call.1} parent=47 // pred_check_branch
          %426 = sbr.rel (%p424) target = $region52
        $region51: #{tpu_custom_call.1} parent=47 // pred_region
          %s427 = sand.u32 %s138, 1
          %s428 = scalar_lea.sflag [#allocation3], %s427
          %s429 = sand.u32 %s138, 1
          %s430 = smul.addr %s429, 8
          %s431 = scalar_lea.vmem [#allocation2], %s430
          %432 = dma.done %s428, 128
        $region52: #{tpu_custom_call.1} parent=47 // pred_fallthru
          _
      $region48: #{tpu_custom_call.1} parent=5 // pred_fallthru
        _
    $region6: #{tpu_custom_call.1} parent=1 // loop_footer
      %s18 = sadd.s32 1, %s14
    $region7: #{tpu_custom_call.1} parent=1 // loop_footer_branch
      %13 = sbr.rel target = $region3
    $region8: #{tpu_custom_call.1} parent=1 // loop_exit
      _
    %433 = vsyncpa [#allocation3], 1
    %s434 = scalar_lea.sflag [#allocation3], 1
    %435 = vsyncpa %s434, 1

</llo_original>
